<compile_context>
chip_gen: v7x
topology: tpu7x:2x2x1
jax: 0.10.0
libtpu: 0.0.40
codegen_flags: <defaults>
</compile_context>

<pallas_src>
import jax
import jax.numpy as jnp
from jax.experimental import pallas as pl
from jax.experimental.pallas import tpu as pltpu

# Small synthetic sizes consistent with the module's __init__:
#   h1 = F/2, h2 = F/4, h3 = F/8, output = F
INPUT_FEATURES = 64
H1 = INPUT_FEATURES // 2   # 32
H2 = INPUT_FEATURES // 4   # 16
H3 = INPUT_FEATURES // 8   # 8
BATCH = 16

LANE = 128                 # lane-dense slab width

# (fan_in, fan_out) for the 6 Linear layers, encoder then decoder.
LAYER_DIMS = [
    (INPUT_FEATURES, H1), (H1, H2), (H2, H3),   # encoder
    (H3, H2), (H2, H1), (H1, INPUT_FEATURES),   # decoder
]
LATENT_LAYER = 2                                # output of layer index 2 is the code

# Row offsets of each weight inside the packed [W_ROWS, LANE] weight slab.
W_OFFSETS = []
_r = 0
for _fi, _fo in LAYER_DIMS:
    W_OFFSETS.append(_r)
    _r += _fi
W_ROWS = _r                                     # 168 (multiple of 8 -> clean sublanes)


def _sigmoid(x):
    # exp -> EUP, approximate reciprocal -> EUP; VPU only does the add/negate.
    return pl.reciprocal(1.0 + jnp.exp(-x), approx=True)


def ae_kernel(x_ref, w_ref, b_ref, out_ref):
    """Fused encoder+decoder forward for one batch tile.

    x_ref  : [tile_b, INPUT_FEATURES] f32
    w_ref  : [W_ROWS, LANE]           f32  (all 6 weights, row-stacked, lane-padded)
    b_ref  : [8, LANE]                f32  (bias of layer i in row i, lanes 0:fan_out)
    out_ref: [tile_b, LANE]           f32  (recon in lanes 0:F, latent in F:F+H3)
    """
    a = x_ref[...].astype(jnp.float32)
    latent = None

    # Fully unrolled at trace time; all slices of the slabs are static.
    for li, (fi, fo) in enumerate(LAYER_DIMS):
        r0 = W_OFFSETS[li]
        w = w_ref[r0:r0 + fi, 0:fo]                      # [fi, fo]
        b = b_ref[li:li + 1, 0:fo]                       # [1, fo] -> broadcasts
        z = jnp.dot(a, w, preferred_element_type=jnp.float32) + b
        a = _sigmoid(z)
        if li == LATENT_LAYER:
            latent = a

    # One lane-dense store: [recon | latent | zero pad] -> [tile_b, 128]
    pad = jnp.zeros((a.shape[0], LANE - INPUT_FEATURES - H3), jnp.float32)
    out_ref[...] = jnp.concatenate([a, latent, pad], axis=-1)


def pack_params(layers):
    """layers: list of (w [fan_in, fan_out], b [fan_out]) -> (w_slab, b_slab)."""
    w_slab = jnp.zeros((W_ROWS, LANE), jnp.float32)
    b_slab = jnp.zeros((8, LANE), jnp.float32)
    for li, (w, b) in enumerate(layers):
        fi, fo = LAYER_DIMS[li]
        assert w.shape == (fi, fo) and b.shape == (fo,)
        w_slab = w_slab.at[W_OFFSETS[li]:W_OFFSETS[li] + fi, :fo].set(w)
        b_slab = b_slab.at[li, :fo].set(b)
    return w_slab, b_slab


def auto_pheno_shallow_forward(x, w_slab, b_slab, *, tile_b=None):
    """x: [B, INPUT_FEATURES] f32 -> (reconstruction [B, F], latent [B, H3])."""
    B, F = x.shape
    assert F == INPUT_FEATURES

    if tile_b is None:
        # Small batch: one grid step (no per-step pipeline overhead).
        # Large batch: MXU-row-aligned tiles; per-tile VMEM footprint is tiny.
        tile_b = B if B <= 256 else 256
    assert B % tile_b == 0
    grid = (B // tile_b,)

    out_slab = pl.pallas_call(
        ae_kernel,
        out_shape=jax.ShapeDtypeStruct((B, LANE), jnp.float32),
        grid_spec=pltpu.PrefetchScalarGridSpec(
            num_scalar_prefetch=0,
            grid=grid,
            in_specs=[
                pl.BlockSpec((tile_b, F), lambda i: (i, 0)),        # x tile
                pl.BlockSpec((W_ROWS, LANE), lambda i: (0, 0)),     # weight slab
                pl.BlockSpec((8, LANE), lambda i: (0, 0)),          # bias slab
            ],
            out_specs=pl.BlockSpec((tile_b, LANE), lambda i: (i, 0)),
        ),
        compiler_params=pltpu.CompilerParams(
            dimension_semantics=("parallel",),
        ),
    )(x, w_slab, b_slab)

    recon = out_slab[:, :INPUT_FEATURES]
    latent = out_slab[:, INPUT_FEATURES:INPUT_FEATURES + H3]
    return recon, latent


def init_layers(key):
    """Deterministic parameter init (uniform, like PyTorch Linear default)."""
    layers = []
    for fan_in, fan_out in LAYER_DIMS:
        key, kw, kb = jax.random.split(key, 3)
        bound = 1.0 / jnp.sqrt(fan_in)
        w = jax.random.uniform(kw, (fan_in, fan_out), jnp.float32, -bound, bound)
        b = jax.random.uniform(kb, (fan_out,), jnp.float32, -bound, bound)
        layers.append((w, b))
    return layers


def reference_forward(x, layers):
    """Plain-JAX reference (same math, exact sigmoid)."""
    a = x
    latent = None
    for li, (w, b) in enumerate(layers):
        a = jax.nn.sigmoid(a @ w + b)
        if li == LATENT_LAYER:
            latent = a
    return a, latent


if __name__ == "__main__":
    key = jax.random.PRNGKey(0)
    key, kx = jax.random.split(key)
    # MinMaxScaler output in the original pipeline is in [0, 1]
    x = jax.random.uniform(kx, (BATCH, INPUT_FEATURES), jnp.float32, 0.0, 1.0)

    layers = init_layers(key)
    w_slab, b_slab = pack_params(layers)

    recon, latent = auto_pheno_shallow_forward(x, w_slab, b_slab)
    recon = jax.block_until_ready(recon)
    latent = jax.block_until_ready(latent)

    ref_recon, ref_latent = reference_forward(x, layers)
    assert recon.shape == (BATCH, INPUT_FEATURES)
    assert latent.shape == (BATCH, H3)
    # Tolerance loosened slightly for pl.reciprocal(approx=True) on the EUP.
    assert jnp.allclose(recon, ref_recon, atol=2e-3)
    assert jnp.allclose(latent, ref_latent, atol=2e-3)

    # TODO(synk): training loop / MSE loss / optimizer from the script are not
    # part of the forward pass and are not translated.
    print("KERNEL_OK")
</pallas_src>

<mosaic_0001>
module attributes {stable_mosaic.version = 11 : i64} {
  func.func @ae_kernel(%arg0: i32, %arg1: memref<16x64xf32, #tpu.memory_space<vmem>>, %arg2: memref<168x128xf32, #tpu.memory_space<vmem>>, %arg3: memref<8x128xf32, #tpu.memory_space<vmem>>, %arg4: memref<16x128xf32, #tpu.memory_space<vmem>>) attributes {dimension_semantics = [#tpu.dimension_semantics<parallel>], iteration_bounds = array<i64: 1>, scalar_prefetch = 0 : i64, scratch_operands = 0 : i64, tpu.core_type = #tpu.core_type<tc>, window_params = [{transform_indices = @transform_0, window_bounds = array<i64: 16, 64>}, {pipeline_mode = #tpu.pipeline_mode<synchronous>, transform_indices = @transform_1, window_bounds = array<i64: 168, 128>}, {pipeline_mode = #tpu.pipeline_mode<synchronous>, transform_indices = @transform_2, window_bounds = array<i64: 8, 128>}, {transform_indices = @transform_3, window_bounds = array<i64: 16, 128>}]} {
    %c0 = arith.constant 0 : index
    %c0_0 = arith.constant 0 : index
    %0 = vector.load %arg1[%c0, %c0_0] : memref<16x64xf32, #tpu.memory_space<vmem>>, vector<16x64xf32>
    %c0_1 = arith.constant 0 : index
    %c0_2 = arith.constant 0 : index
    %1 = vector.load %arg2[%c0_1, %c0_2] : memref<168x128xf32, #tpu.memory_space<vmem>>, vector<64x32xf32>
    %c0_3 = arith.constant 0 : index
    %c0_4 = arith.constant 0 : index
    %2 = vector.load %arg3[%c0_3, %c0_4] : memref<8x128xf32, #tpu.memory_space<vmem>>, vector<1x32xf32>
    %cst = arith.constant dense<0.000000e+00> : vector<16x32xf32>
    %3 = tpu.matmul %0, %1, %cst {dimension_numbers = #tpu.dot_dimension_numbers<[1], [0], [0], [1], [0, 0, 1, 1], [], []>} : vector<16x64xf32>, vector<64x32xf32>, vector<16x32xf32> -> vector<16x32xf32>
    %4 = vector.broadcast %2 : vector<1x32xf32> to vector<16x32xf32>
    %5 = arith.addf %3, %4 : vector<16x32xf32>
    %cst_5 = arith.constant 0.000000e+00 : f32
    %6 = vector.broadcast %cst_5 : f32 to vector<16x32xf32>
    %7 = arith.subf %6, %5 : vector<16x32xf32>
    %8 = math.exp %7 : vector<16x32xf32>
    %cst_6 = arith.constant 1.000000e+00 : f32
    %9 = vector.broadcast %cst_6 : f32 to vector<16x32xf32>
    %10 = arith.addf %9, %8 : vector<16x32xf32>
    %11 = tpu.reciprocal %10 {approx = true} : vector<16x32xf32> -> vector<16x32xf32>
    %c64 = arith.constant 64 : index
    %c0_7 = arith.constant 0 : index
    %12 = vector.load %arg2[%c64, %c0_7] : memref<168x128xf32, #tpu.memory_space<vmem>>, vector<32x16xf32>
    %c1 = arith.constant 1 : index
    %c0_8 = arith.constant 0 : index
    %13 = vector.load %arg3[%c1, %c0_8] : memref<8x128xf32, #tpu.memory_space<vmem>>, vector<1x16xf32>
    %cst_9 = arith.constant dense<0.000000e+00> : vector<16x16xf32>
    %14 = tpu.matmul %11, %12, %cst_9 {dimension_numbers = #tpu.dot_dimension_numbers<[1], [0], [0], [1], [0, 0, 1, 1], [], []>} : vector<16x32xf32>, vector<32x16xf32>, vector<16x16xf32> -> vector<16x16xf32>
    %15 = vector.broadcast %13 : vector<1x16xf32> to vector<16x16xf32>
    %16 = arith.addf %14, %15 : vector<16x16xf32>
    %cst_10 = arith.constant 0.000000e+00 : f32
    %17 = vector.broadcast %cst_10 : f32 to vector<16x16xf32>
    %18 = arith.subf %17, %16 : vector<16x16xf32>
    %19 = math.exp %18 : vector<16x16xf32>
    %cst_11 = arith.constant 1.000000e+00 : f32
    %20 = vector.broadcast %cst_11 : f32 to vector<16x16xf32>
    %21 = arith.addf %20, %19 : vector<16x16xf32>
    %22 = tpu.reciprocal %21 {approx = true} : vector<16x16xf32> -> vector<16x16xf32>
    %c96 = arith.constant 96 : index
    %c0_12 = arith.constant 0 : index
    %23 = vector.load %arg2[%c96, %c0_12] : memref<168x128xf32, #tpu.memory_space<vmem>>, vector<16x8xf32>
    %c2 = arith.constant 2 : index
    %c0_13 = arith.constant 0 : index
    %24 = vector.load %arg3[%c2, %c0_13] : memref<8x128xf32, #tpu.memory_space<vmem>>, vector<1x8xf32>
    %cst_14 = arith.constant dense<0.000000e+00> : vector<16x8xf32>
    %25 = tpu.matmul %22, %23, %cst_14 {dimension_numbers = #tpu.dot_dimension_numbers<[1], [0], [0], [1], [0, 0, 1, 1], [], []>} : vector<16x16xf32>, vector<16x8xf32>, vector<16x8xf32> -> vector<16x8xf32>
    %26 = vector.broadcast %24 : vector<1x8xf32> to vector<16x8xf32>
    %27 = arith.addf %25, %26 : vector<16x8xf32>
    %cst_15 = arith.constant 0.000000e+00 : f32
    %28 = vector.broadcast %cst_15 : f32 to vector<16x8xf32>
    %29 = arith.subf %28, %27 : vector<16x8xf32>
    %30 = math.exp %29 : vector<16x8xf32>
    %cst_16 = arith.constant 1.000000e+00 : f32
    %31 = vector.broadcast %cst_16 : f32 to vector<16x8xf32>
    %32 = arith.addf %31, %30 : vector<16x8xf32>
    %33 = tpu.reciprocal %32 {approx = true} : vector<16x8xf32> -> vector<16x8xf32>
    %c112 = arith.constant 112 : index
    %c0_17 = arith.constant 0 : index
    %34 = vector.load %arg2[%c112, %c0_17] : memref<168x128xf32, #tpu.memory_space<vmem>>, vector<8x16xf32>
    %c3 = arith.constant 3 : index
    %c0_18 = arith.constant 0 : index
    %35 = vector.load %arg3[%c3, %c0_18] : memref<8x128xf32, #tpu.memory_space<vmem>>, vector<1x16xf32>
    %cst_19 = arith.constant dense<0.000000e+00> : vector<16x16xf32>
    %36 = tpu.matmul %33, %34, %cst_19 {dimension_numbers = #tpu.dot_dimension_numbers<[1], [0], [0], [1], [0, 0, 1, 1], [], []>} : vector<16x8xf32>, vector<8x16xf32>, vector<16x16xf32> -> vector<16x16xf32>
    %37 = vector.broadcast %35 : vector<1x16xf32> to vector<16x16xf32>
    %38 = arith.addf %36, %37 : vector<16x16xf32>
    %cst_20 = arith.constant 0.000000e+00 : f32
    %39 = vector.broadcast %cst_20 : f32 to vector<16x16xf32>
    %40 = arith.subf %39, %38 : vector<16x16xf32>
    %41 = math.exp %40 : vector<16x16xf32>
    %cst_21 = arith.constant 1.000000e+00 : f32
    %42 = vector.broadcast %cst_21 : f32 to vector<16x16xf32>
    %43 = arith.addf %42, %41 : vector<16x16xf32>
    %44 = tpu.reciprocal %43 {approx = true} : vector<16x16xf32> -> vector<16x16xf32>
    %c120 = arith.constant 120 : index
    %c0_22 = arith.constant 0 : index
    %45 = vector.load %arg2[%c120, %c0_22] : memref<168x128xf32, #tpu.memory_space<vmem>>, vector<16x32xf32>
    %c4 = arith.constant 4 : index
    %c0_23 = arith.constant 0 : index
    %46 = vector.load %arg3[%c4, %c0_23] : memref<8x128xf32, #tpu.memory_space<vmem>>, vector<1x32xf32>
    %cst_24 = arith.constant dense<0.000000e+00> : vector<16x32xf32>
    %47 = tpu.matmul %44, %45, %cst_24 {dimension_numbers = #tpu.dot_dimension_numbers<[1], [0], [0], [1], [0, 0, 1, 1], [], []>} : vector<16x16xf32>, vector<16x32xf32>, vector<16x32xf32> -> vector<16x32xf32>
    %48 = vector.broadcast %46 : vector<1x32xf32> to vector<16x32xf32>
    %49 = arith.addf %47, %48 : vector<16x32xf32>
    %cst_25 = arith.constant 0.000000e+00 : f32
    %50 = vector.broadcast %cst_25 : f32 to vector<16x32xf32>
    %51 = arith.subf %50, %49 : vector<16x32xf32>
    %52 = math.exp %51 : vector<16x32xf32>
    %cst_26 = arith.constant 1.000000e+00 : f32
    %53 = vector.broadcast %cst_26 : f32 to vector<16x32xf32>
    %54 = arith.addf %53, %52 : vector<16x32xf32>
    %55 = tpu.reciprocal %54 {approx = true} : vector<16x32xf32> -> vector<16x32xf32>
    %c136 = arith.constant 136 : index
    %c0_27 = arith.constant 0 : index
    %56 = vector.load %arg2[%c136, %c0_27] : memref<168x128xf32, #tpu.memory_space<vmem>>, vector<32x64xf32>
    %c5 = arith.constant 5 : index
    %c0_28 = arith.constant 0 : index
    %57 = vector.load %arg3[%c5, %c0_28] : memref<8x128xf32, #tpu.memory_space<vmem>>, vector<1x64xf32>
    %cst_29 = arith.constant dense<0.000000e+00> : vector<16x64xf32>
    %58 = tpu.matmul %55, %56, %cst_29 {dimension_numbers = #tpu.dot_dimension_numbers<[1], [0], [0], [1], [0, 0, 1, 1], [], []>} : vector<16x32xf32>, vector<32x64xf32>, vector<16x64xf32> -> vector<16x64xf32>
    %59 = vector.broadcast %57 : vector<1x64xf32> to vector<16x64xf32>
    %60 = arith.addf %58, %59 : vector<16x64xf32>
    %cst_30 = arith.constant 0.000000e+00 : f32
    %61 = vector.broadcast %cst_30 : f32 to vector<16x64xf32>
    %62 = arith.subf %61, %60 : vector<16x64xf32>
    %63 = math.exp %62 : vector<16x64xf32>
    %cst_31 = arith.constant 1.000000e+00 : f32
    %64 = vector.broadcast %cst_31 : f32 to vector<16x64xf32>
    %65 = arith.addf %64, %63 : vector<16x64xf32>
    %66 = tpu.reciprocal %65 {approx = true} : vector<16x64xf32> -> vector<16x64xf32>
    %cst_32 = arith.constant 0.000000e+00 : f32
    %67 = vector.broadcast %cst_32 : f32 to vector<16x56xf32>
    %68 = tpu.concatenate %66, %33, %67 in 1 : vector<16x64xf32>, vector<16x8xf32>, vector<16x56xf32> -> vector<16x128xf32>
    %c0_33 = arith.constant 0 : index
    %c0_34 = arith.constant 0 : index
    %69 = vector.load %arg4[%c0_33, %c0_34] : memref<16x128xf32, #tpu.memory_space<vmem>>, vector<16x128xf32>
    tpu.vector_store %arg4[%c0_33, %c0_34], %68 {strides = array<i32>} : memref<16x128xf32, #tpu.memory_space<vmem>>, vector<16x128xf32>,
    return
  }
  func.func @transform_0(%arg0: i32) -> (i32, i32) {
    %c0_i32 = arith.constant 0 : i32
    %c0_i32_0 = arith.constant 0 : i32
    return %arg0, %c0_i32 : i32, i32
  }
  func.func @transform_1(%arg0: i32) -> (i32, i32) {
    %c0_i32 = arith.constant 0 : i32
    %c0_i32_0 = arith.constant 0 : i32
    %c0_i32_1 = arith.constant 0 : i32
    return %c0_i32, %c0_i32_0 : i32, i32
  }
  func.func @transform_2(%arg0: i32) -> (i32, i32) {
    %c0_i32 = arith.constant 0 : i32
    %c0_i32_0 = arith.constant 0 : i32
    %c0_i32_1 = arith.constant 0 : i32
    return %c0_i32, %c0_i32_0 : i32, i32
  }
  func.func @transform_3(%arg0: i32) -> (i32, i32) {
    %c0_i32 = arith.constant 0 : i32
    %c0_i32_0 = arith.constant 0 : i32
    return %arg0, %c0_i32 : i32, i32
  }
}

</mosaic_0001>

<llo_original>
// kernel: tpu_custom_call.1
$region0: #{tpu_custom_call.1}
  #allocation0 [shape = 'u32[]', space=smem, size = 0x4, offset = 0x4, fixed_abs, tag = 'smem constant byte address 0x4 - core index']
  #allocation1 [shape = 'u32[144,128]{1,0:T(1,128)}', space=vmem, size = 0x12000, scoped, tag = 'internal scratch']
  %s0 = inlined_call_operand.hbm [shape: f32[16,64], index: 0, kind: input, shape index: {}]
  %s1 = inlined_call_operand.hbm [shape: f32[168,128], index: 1, kind: input, shape index: {}]
  %s2 = inlined_call_operand.hbm [shape: f32[8,128], index: 2, kind: input, shape index: {}]
  %s3 = inlined_call_operand.hbm [shape: f32[16,128], index: 3, kind: output, shape index: {}]
  %s4 = sld [smem:[#allocation0]]
  $region34: #{tpu_custom_call.1} parent=0
    _
  %s6 = ssub.s32 1, %s4
  %s7 = scalar_select 0, %s6, %s4
  $region1: #{tpu_custom_call.1} parent=0
    #allocation2 [shape = 'u8[8192]{0}', space=vmem, size = 0x2000, scoped, tag = 'input window, operand 0, single buffered']
    #allocation3 [shape = 's32[1]{0}', space=sflag, size = 0x4, scoped, tag = 'scoped memory for tpu_custom_call.1']
    #allocation4 [shape = 's32[1]{0}', space=sflag, size = 0x4, scoped, tag = 'scoped memory for tpu_custom_call.1']
    #allocation5 [shape = 'u8[86016]{0}', space=vmem, size = 0x15000, scoped, tag = 'input window, operand 1, single buffered']
    #allocation6 [shape = 's32[1]{0}', space=sflag, size = 0x4, scoped, tag = 'scoped memory for tpu_custom_call.1']
    #allocation7 [shape = 'u8[4096]{0}', space=vmem, size = 0x1000, scoped, tag = 'input window, operand 2, single buffered']
    #allocation8 [shape = 'u8[8192]{0}', space=vmem, size = 0x2000, scoped, tag = 'output window, operand 0, single buffered']
    %8 = vsyncpa [#allocation3], 0
    %9 = vsyncpa [#allocation6], 0
    %10 = vsyncpa [#allocation4], 0
    // Predicated region
    $region2: #{tpu_custom_call.1} parent=1 // pred_check
      _
    $region3: #{tpu_custom_call.1} parent=1 // pred_check_branch
      %12 = sbr.rel (0) target = $region5
    $region4: #{tpu_custom_call.1} parent=1 // pred_region
      %s14 = ssub.s32 256, 256
      %15 = vsyncadd [#allocation3], %s14
      %s16 = sshll.u32 [#allocation2], 4
      %s17 = int_to_ptr.vmem [resolvable:$true] %s16
      %22 = dma.hbm_to_vmem [thread:$0]  %s0, 256, %s17, [#allocation3], 128, 128, 8
    $region5: #{tpu_custom_call.1} parent=1 // pred_fallthru
      _
    // Predicated region
    $region6: #{tpu_custom_call.1} parent=1 // pred_check
      _
    $region7: #{tpu_custom_call.1} parent=1 // pred_check_branch
      %24 = sbr.rel (0) target = $region9
    $region8: #{tpu_custom_call.1} parent=1 // pred_region
      %s26 = ssub.s32 2688, 2688
      %27 = vsyncadd [#allocation6], %s26
      %s28 = sshll.u32 [#allocation5], 4
      %s29 = int_to_ptr.vmem [resolvable:$true] %s28
      %34 = dma.hbm_to_vmem [thread:$0]  %s1, 2688, %s29, [#allocation6], 128, 128, 8
    $region9: #{tpu_custom_call.1} parent=1 // pred_fallthru
      _
    // Predicated region
    $region10: #{tpu_custom_call.1} parent=1 // pred_check
      _
    $region11: #{tpu_custom_call.1} parent=1 // pred_check_branch
      %36 = sbr.rel (0) target = $region13
    $region12: #{tpu_custom_call.1} parent=1 // pred_region
      %s38 = ssub.s32 128, 128
      %39 = vsyncadd [#allocation6], %s38
      %s41 = sshll.u32 [#allocation7], 4
      %s42 = int_to_ptr.vmem [resolvable:$true] %s41
      %44 = dma.hbm_to_vmem [thread:$0]  %s2, 128, %s42, [#allocation6]
    $region13: #{tpu_custom_call.1} parent=1 // pred_fallthru
      _
    // Predicated region
    $region14: #{tpu_custom_call.1} parent=1 // pred_check
      _
    $region15: #{tpu_custom_call.1} parent=1 // pred_check_branch
      %46 = sbr.rel (0) target = $region17
    $region16: #{tpu_custom_call.1} parent=1 // pred_region
      %47 = dma.done [#allocation3], 256
    $region17: #{tpu_custom_call.1} parent=1 // pred_fallthru
      _
    // Predicated region
    $region18: #{tpu_custom_call.1} parent=1 // pred_check
      _
    $region19: #{tpu_custom_call.1} parent=1 // pred_check_branch
      %49 = sbr.rel (0) target = $region21
    $region20: #{tpu_custom_call.1} parent=1 // pred_region
      %50 = dma.done [#allocation6], 2688
    $region21: #{tpu_custom_call.1} parent=1 // pred_fallthru
      _
    // Predicated region
    $region22: #{tpu_custom_call.1} parent=1 // pred_check
      _
    $region23: #{tpu_custom_call.1} parent=1 // pred_check_branch
      %52 = sbr.rel (0) target = $region25
    $region24: #{tpu_custom_call.1} parent=1 // pred_region
      %53 = dma.done [#allocation6], 128
    $region25: #{tpu_custom_call.1} parent=1 // pred_fallthru
      _
    %v54 = vld [vmem:[#allocation2] sm:$0xff]
    %v55 = vld [vmem:[#allocation2 + $0x8] sm:$0xff]
    %v56 = vld [vmem:[#allocation5] sm:$0xff]
    %v57 = vld [vmem:[#allocation5 + $0x8] sm:$0xff]
    %v58 = vld [vmem:[#allocation5 + $0x10] sm:$0xff]
    %v59 = vld [vmem:[#allocation5 + $0x18] sm:$0xff]
    %v60 = vld [vmem:[#allocation5 + $0x20] sm:$0xff]
    %v61 = vld [vmem:[#allocation5 + $0x28] sm:$0xff]
    %v62 = vld [vmem:[#allocation5 + $0x30] sm:$0xff]
    %v63 = vld [vmem:[#allocation5 + $0x38] sm:$0xff]
    %v64 = vld [vmem:[#allocation7] sm:$0x1]
    %v65 = vlaneseq
    %v66 = vshrl.u32 %v65, 7
    %v67 = vsub.s32 0, %v66
    %v68 = vrot.slane %v64, %v67
    %vm69 = vcmask 523264
    %v71 = vsel %vm69, %v54, 0
    %v74 = vsel %vm69, %v55, 0
    %76 = vmatprep.subr.mxu0 0.0
    %77 = vmatpush1.msra.mxu0 %v56
    %78 = vmatprep.subr.mxu0 0.0
    %79 = vmatpush1.msra.mxu0 %v57
    %80 = vmatprep.subr.mxu0 0.0
    %81 = vmatpush1.msra.mxu0 %v58
    %82 = vmatprep.subr.mxu0 0.0
    %83 = vmatpush1.msra.mxu0 %v59
    %84 = vmatprep.subr.mxu0 0.0
    %85 = vmatpush1.msra.mxu0 %v60
    %86 = vmatprep.subr.mxu0 0.0
    %87 = vmatpush1.msra.mxu0 %v61
    %88 = vmatprep.subr.mxu0 0.0
    %89 = vmatpush1.msra.mxu0 %v62
    %90 = vmatprep.subr.mxu0 0.0
    %91 = vmatpush1.msra.mxu0 %v63
    %92 = vmatprep.subr.mxu0 0.0
    %93 = vmatpush1.msra.mxu0 0.0
    %94 = vmatprep.subr.mxu0 0.0
    %95 = vmatpush1.msra.mxu0 0.0
    %96 = vmatprep.subr.mxu0 0.0
    %97 = vmatpush1.msra.mxu0 0.0
    %98 = vmatprep.subr.mxu0 0.0
    %99 = vmatpush1.msra.mxu0 0.0
    %100 = vmatprep.subr.mxu0 0.0
    %101 = vmatpush1.msra.mxu0 0.0
    %102 = vmatprep.subr.mxu0 0.0
    %103 = vmatpush1.msra.mxu0 0.0
    %104 = vmatprep.subr.mxu0 0.0
    %105 = vmatpush1.msra.mxu0 0.0
    %106 = vmatprep.subr.mxu0 0.0
    %107 = vmatpush1.msra.mxu0 0.0
    %108 = vmatprep.subr.mxu0 0.0
    %109 = vmatpush1.msra.mxu0 0.0
    %110 = vmatprep.subr.mxu0 0.0
    %111 = vmatpush1.msra.mxu0 0.0
    %112 = vmatprep.subr.mxu0 0.0
    %113 = vmatpush1.msra.mxu0 0.0
    %114 = vmatprep.subr.mxu0 0.0
    %115 = vmatpush1.msra.mxu0 0.0
    %116 = vmatprep.subr.mxu0 0.0
    %117 = vmatpush1.msra.mxu0 0.0
    %118 = vmatprep.subr.mxu0 0.0
    %119 = vmatpush1.msra.mxu0 0.0
    %120 = vmatprep.subr.mxu0 0.0
    %121 = vmatpush1.msra.mxu0 0.0
    %122 = vmatprep.subr.mxu0 0.0
    %123 = vmatpush1.msra.mxu0 0.0
    %124 = vmatprep.subr.mxu0 0.0
    %125 = vmatpush1.msra.mxu0 0.0
    %126 = vmatprep.subr.mxu0 0.0
    %127 = vmatpush1.msra.mxu0 0.0
    %128 = vmatprep.subr.mxu0 0.0
    %129 = vmatpush1.msra.mxu0 0.0
    %130 = vmatprep.subr.mxu0 0.0
    %131 = vmatpush1.msra.mxu0 0.0
    %132 = vmatprep.subr.mxu0 0.0
    %133 = vmatpush1.msra.mxu0 0.0
    %134 = vmatprep.subr.mxu0 0.0
    %135 = vmatpush1.msra.mxu0 0.0
    %136 = vmatprep.subr.mxu0 0.0
    %137 = vmatpush1.msra.mxu0 0.0
    %138 = vmatprep.subr.mxu0 0.0
    %139 = vmatpush1.msra.mxu0 0.0
    %140 = vmatprep.mubr.f32.mxu0 0.0
    %141 = vmatmul.mubr.f32.gmra.mrb[0].mxu0 %v71
    %v142 = vpop.f32.mrb[0].mxu0
    %v143 = vadd.f32 %v68, %v142
    %v144 = vpop.f32.mrb[0].mxu0
    %145 = vmatprep.mubr.f32.mxu0 0.0
    %146 = vmatmul.mubr.f32.gmra.mrb[0].mxu0 %v74
    %v147 = vpop.f32.mrb[0].mxu0
    %v148 = vadd.f32 %v68, %v147
    %v149 = vpop.f32.mrb[0].mxu0
    %150 = vdwg.mxu0
    %v151 = vsub.f32 0.0, %v143
    %v152 = vsub.f32 0.0, %v148
    %v153 = vmul.f32 %v151, 1.442695
    %v154 = vpow.pop %v153
    %v155 = vmul.f32 %v152, 1.442695
    %v156 = vpow.pop %v155
    %v157 = vadd.f32 %v154, 1.0
    %v158 = vadd.f32 %v156, 1.0
    %v159 = vrcp.pop %v157
    %v160 = vrcp.pop %v158
    %v161 = vld [vmem:[#allocation5 + $0x40] sm:$0xff]
    %v162 = vld [vmem:[#allocation5 + $0x48] sm:$0xff]
    %v163 = vld [vmem:[#allocation5 + $0x50] sm:$0xff]
    %v164 = vld [vmem:[#allocation5 + $0x58] sm:$0xff]
    %v165 = vld [vmem:[#allocation7 + $0x1] sm:$0x1]
    %v166 = vlaneseq
    %v167 = vshrl.u32 %v166, 7
    %v168 = vsub.s32 0, %v167
    %v169 = vrot.slane %v165, %v168
    %vm170 = vcmask 261120
    %v172 = vsel %vm170, %v159, 0
    %v175 = vsel %vm170, %v160, 0
    %177 = vmatprep.subr.mxu0 0.0
    %178 = vmatpush1.msra.mxu0 %v161
    %179 = vmatprep.subr.mxu0 0.0
    %180 = vmatpush1.msra.mxu0 %v162
    %181 = vmatprep.subr.mxu0 0.0
    %182 = vmatpush1.msra.mxu0 %v163
    %183 = vmatprep.subr.mxu0 0.0
    %184 = vmatpush1.msra.mxu0 %v164
    %185 = vmatprep.subr.mxu0 0.0
    %186 = vmatpush1.msra.mxu0 0.0
    %187 = vmatprep.subr.mxu0 0.0
    %188 = vmatpush1.msra.mxu0 0.0
    %189 = vmatprep.subr.mxu0 0.0
    %190 = vmatpush1.msra.mxu0 0.0
    %191 = vmatprep.subr.mxu0 0.0
    %192 = vmatpush1.msra.mxu0 0.0
    %193 = vmatprep.subr.mxu0 0.0
    %194 = vmatpush1.msra.mxu0 0.0
    %195 = vmatprep.subr.mxu0 0.0
    %196 = vmatpush1.msra.mxu0 0.0
    %197 = vmatprep.subr.mxu0 0.0
    %198 = vmatpush1.msra.mxu0 0.0
    %199 = vmatprep.subr.mxu0 0.0
    %200 = vmatpush1.msra.mxu0 0.0
    %201 = vmatprep.subr.mxu0 0.0
    %202 = vmatpush1.msra.mxu0 0.0
    %203 = vmatprep.subr.mxu0 0.0
    %204 = vmatpush1.msra.mxu0 0.0
    %205 = vmatprep.subr.mxu0 0.0
    %206 = vmatpush1.msra.mxu0 0.0
    %207 = vmatprep.subr.mxu0 0.0
    %208 = vmatpush1.msra.mxu0 0.0
    %209 = vmatprep.subr.mxu0 0.0
    %210 = vmatpush1.msra.mxu0 0.0
    %211 = vmatprep.subr.mxu0 0.0
    %212 = vmatpush1.msra.mxu0 0.0
    %213 = vmatprep.subr.mxu0 0.0
    %214 = vmatpush1.msra.mxu0 0.0
    %215 = vmatprep.subr.mxu0 0.0
    %216 = vmatpush1.msra.mxu0 0.0
    %217 = vmatprep.subr.mxu0 0.0
    %218 = vmatpush1.msra.mxu0 0.0
    %219 = vmatprep.subr.mxu0 0.0
    %220 = vmatpush1.msra.mxu0 0.0
    %221 = vmatprep.subr.mxu0 0.0
    %222 = vmatpush1.msra.mxu0 0.0
    %223 = vmatprep.subr.mxu0 0.0
    %224 = vmatpush1.msra.mxu0 0.0
    %225 = vmatprep.subr.mxu0 0.0
    %226 = vmatpush1.msra.mxu0 0.0
    %227 = vmatprep.subr.mxu0 0.0
    %228 = vmatpush1.msra.mxu0 0.0
    %229 = vmatprep.subr.mxu0 0.0
    %230 = vmatpush1.msra.mxu0 0.0
    %231 = vmatprep.subr.mxu0 0.0
    %232 = vmatpush1.msra.mxu0 0.0
    %233 = vmatprep.subr.mxu0 0.0
    %234 = vmatpush1.msra.mxu0 0.0
    %235 = vmatprep.subr.mxu0 0.0
    %236 = vmatpush1.msra.mxu0 0.0
    %237 = vmatprep.subr.mxu0 0.0
    %238 = vmatpush1.msra.mxu0 0.0
    %239 = vmatprep.subr.mxu0 0.0
    %240 = vmatpush1.msra.mxu0 0.0
    %241 = vmatprep.mubr.f32.mxu0 0.0
    %242 = vmatmul.mubr.f32.gmra.mrb[0].mxu0 %v172
    %v243 = vpop.f32.mrb[0].mxu0
    %v244 = vadd.f32 %v169, %v243
    %v245 = vpop.f32.mrb[0].mxu0
    %246 = vmatprep.mubr.f32.mxu0 0.0
    %247 = vmatmul.mubr.f32.gmra.mrb[0].mxu0 %v175
    %v248 = vpop.f32.mrb[0].mxu0
    %v249 = vadd.f32 %v169, %v248
    %v250 = vpop.f32.mrb[0].mxu0
    %251 = vdwg.mxu0
    %v252 = vsub.f32 0.0, %v244
    %v253 = vsub.f32 0.0, %v249
    %v254 = vmul.f32 %v252, 1.442695
    %v255 = vpow.pop %v254
    %v256 = vmul.f32 %v253, 1.442695
    %v257 = vpow.pop %v256
    %v258 = vadd.f32 %v255, 1.0
    %v259 = vadd.f32 %v257, 1.0
    %v260 = vrcp.pop %v258
    %v261 = vrcp.pop %v259
    %v262 = vld [vmem:[#allocation5 + $0x60] sm:$0xff]
    %v263 = vld [vmem:[#allocation5 + $0x68] sm:$0xff]
    %v264 = vld [vmem:[#allocation7 + $0x2] sm:$0x1]
    %v265 = vlaneseq
    %v266 = vshrl.u32 %v265, 7
    %v267 = vsub.s32 0, %v266
    %v268 = vrot.slane %v264, %v267
    %vm269 = vcmask 130048
    %v271 = vsel %vm269, %v260, 0
    %v274 = vsel %vm269, %v261, 0
    %276 = vmatprep.subr.mxu0 0.0
    %277 = vmatpush1.msra.mxu0 %v262
    %278 = vmatprep.subr.mxu0 0.0
    %279 = vmatpush1.msra.mxu0 %v263
    %280 = vmatprep.subr.mxu0 0.0
    %281 = vmatpush1.msra.mxu0 0.0
    %282 = vmatprep.subr.mxu0 0.0
    %283 = vmatpush1.msra.mxu0 0.0
    %284 = vmatprep.subr.mxu0 0.0
    %285 = vmatpush1.msra.mxu0 0.0
    %286 = vmatprep.subr.mxu0 0.0
    %287 = vmatpush1.msra.mxu0 0.0
    %288 = vmatprep.subr.mxu0 0.0
    %289 = vmatpush1.msra.mxu0 0.0
    %290 = vmatprep.subr.mxu0 0.0
    %291 = vmatpush1.msra.mxu0 0.0
    %292 = vmatprep.subr.mxu0 0.0
    %293 = vmatpush1.msra.mxu0 0.0
    %294 = vmatprep.subr.mxu0 0.0
    %295 = vmatpush1.msra.mxu0 0.0
    %296 = vmatprep.subr.mxu0 0.0
    %297 = vmatpush1.msra.mxu0 0.0
    %298 = vmatprep.subr.mxu0 0.0
    %299 = vmatpush1.msra.mxu0 0.0
    %300 = vmatprep.subr.mxu0 0.0
    %301 = vmatpush1.msra.mxu0 0.0
    %302 = vmatprep.subr.mxu0 0.0
    %303 = vmatpush1.msra.mxu0 0.0
    %304 = vmatprep.subr.mxu0 0.0
    %305 = vmatpush1.msra.mxu0 0.0
    %306 = vmatprep.subr.mxu0 0.0
    %307 = vmatpush1.msra.mxu0 0.0
    %308 = vmatprep.subr.mxu0 0.0
    %309 = vmatpush1.msra.mxu0 0.0
    %310 = vmatprep.subr.mxu0 0.0
    %311 = vmatpush1.msra.mxu0 0.0
    %312 = vmatprep.subr.mxu0 0.0
    %313 = vmatpush1.msra.mxu0 0.0
    %314 = vmatprep.subr.mxu0 0.0
    %315 = vmatpush1.msra.mxu0 0.0
    %316 = vmatprep.subr.mxu0 0.0
    %317 = vmatpush1.msra.mxu0 0.0
    %318 = vmatprep.subr.mxu0 0.0
    %319 = vmatpush1.msra.mxu0 0.0
    %320 = vmatprep.subr.mxu0 0.0
    %321 = vmatpush1.msra.mxu0 0.0
    %322 = vmatprep.subr.mxu0 0.0
    %323 = vmatpush1.msra.mxu0 0.0
    %324 = vmatprep.subr.mxu0 0.0
    %325 = vmatpush1.msra.mxu0 0.0
    %326 = vmatprep.subr.mxu0 0.0
    %327 = vmatpush1.msra.mxu0 0.0
    %328 = vmatprep.subr.mxu0 0.0
    %329 = vmatpush1.msra.mxu0 0.0
    %330 = vmatprep.subr.mxu0 0.0
    %331 = vmatpush1.msra.mxu0 0.0
    %332 = vmatprep.subr.mxu0 0.0
    %333 = vmatpush1.msra.mxu0 0.0
    %334 = vmatprep.subr.mxu0 0.0
    %335 = vmatpush1.msra.mxu0 0.0
    %336 = vmatprep.subr.mxu0 0.0
    %337 = vmatpush1.msra.mxu0 0.0
    %338 = vmatprep.subr.mxu0 0.0
    %339 = vmatpush1.msra.mxu0 0.0
    %340 = vmatprep.mubr.f32.mxu0 0.0
    %341 = vmatmul.mubr.f32.gmra.mrb[0].mxu0 %v271
    %v342 = vpop.f32.mrb[0].mxu0
    %v343 = vadd.f32 %v268, %v342
    %v344 = vpop.f32.mrb[0].mxu0
    %345 = vmatprep.mubr.f32.mxu0 0.0
    %346 = vmatmul.mubr.f32.gmra.mrb[0].mxu0 %v274
    %v347 = vpop.f32.mrb[0].mxu0
    %v348 = vadd.f32 %v268, %v347
    %v349 = vpop.f32.mrb[0].mxu0
    %350 = vdwg.mxu0
    %v351 = vsub.f32 0.0, %v343
    %v352 = vsub.f32 0.0, %v348
    %v353 = vmul.f32 %v351, 1.442695
    %v354 = vpow.pop %v353
    %v355 = vmul.f32 %v352, 1.442695
    %v356 = vpow.pop %v355
    %v357 = vadd.f32 %v354, 1.0
    %v358 = vadd.f32 %v356, 1.0
    %v359 = vrcp.pop %v357
    %v360 = vrcp.pop %v358
    %v361 = vld [vmem:[#allocation5 + $0x70] sm:$0xff]
    %v362 = vld [vmem:[#allocation7 + $0x3] sm:$0x1]
    %v363 = vlaneseq
    %v364 = vshrl.u32 %v363, 7
    %v365 = vsub.s32 0, %v364
    %v366 = vrot.slane %v362, %v365
    %vm367 = vcmask 64512
    %v369 = vsel %vm367, %v359, 0
    %v372 = vsel %vm367, %v360, 0
    %374 = vmatprep.subr.mxu0 0.0
    %375 = vmatpush1.msra.mxu0 %v361
    %376 = vmatprep.subr.mxu0 0.0
    %377 = vmatpush1.msra.mxu0 0.0
    %378 = vmatprep.subr.mxu0 0.0
    %379 = vmatpush1.msra.mxu0 0.0
    %380 = vmatprep.subr.mxu0 0.0
    %381 = vmatpush1.msra.mxu0 0.0
    %382 = vmatprep.subr.mxu0 0.0
    %383 = vmatpush1.msra.mxu0 0.0
    %384 = vmatprep.subr.mxu0 0.0
    %385 = vmatpush1.msra.mxu0 0.0
    %386 = vmatprep.subr.mxu0 0.0
    %387 = vmatpush1.msra.mxu0 0.0
    %388 = vmatprep.subr.mxu0 0.0
    %389 = vmatpush1.msra.mxu0 0.0
    %390 = vmatprep.subr.mxu0 0.0
    %391 = vmatpush1.msra.mxu0 0.0
    %392 = vmatprep.subr.mxu0 0.0
    %393 = vmatpush1.msra.mxu0 0.0
    %394 = vmatprep.subr.mxu0 0.0
    %395 = vmatpush1.msra.mxu0 0.0
    %396 = vmatprep.subr.mxu0 0.0
    %397 = vmatpush1.msra.mxu0 0.0
    %398 = vmatprep.subr.mxu0 0.0
    %399 = vmatpush1.msra.mxu0 0.0
    %400 = vmatprep.subr.mxu0 0.0
    %401 = vmatpush1.msra.mxu0 0.0
    %402 = vmatprep.subr.mxu0 0.0
    %403 = vmatpush1.msra.mxu0 0.0
    %404 = vmatprep.subr.mxu0 0.0
    %405 = vmatpush1.msra.mxu0 0.0
    %406 = vmatprep.subr.mxu0 0.0
    %407 = vmatpush1.msra.mxu0 0.0
    %408 = vmatprep.subr.mxu0 0.0
    %409 = vmatpush1.msra.mxu0 0.0
    %410 = vmatprep.subr.mxu0 0.0
    %411 = vmatpush1.msra.mxu0 0.0
    %412 = vmatprep.subr.mxu0 0.0
    %413 = vmatpush1.msra.mxu0 0.0
    %414 = vmatprep.subr.mxu0 0.0
    %415 = vmatpush1.msra.mxu0 0.0
    %416 = vmatprep.subr.mxu0 0.0
    %417 = vmatpush1.msra.mxu0 0.0
    %418 = vmatprep.subr.mxu0 0.0
    %419 = vmatpush1.msra.mxu0 0.0
    %420 = vmatprep.subr.mxu0 0.0
    %421 = vmatpush1.msra.mxu0 0.0
    %422 = vmatprep.subr.mxu0 0.0
    %423 = vmatpush1.msra.mxu0 0.0
    %424 = vmatprep.subr.mxu0 0.0
    %425 = vmatpush1.msra.mxu0 0.0
    %426 = vmatprep.subr.mxu0 0.0
    %427 = vmatpush1.msra.mxu0 0.0
    %428 = vmatprep.subr.mxu0 0.0
    %429 = vmatpush1.msra.mxu0 0.0
    %430 = vmatprep.subr.mxu0 0.0
    %431 = vmatpush1.msra.mxu0 0.0
    %432 = vmatprep.subr.mxu0 0.0
    %433 = vmatpush1.msra.mxu0 0.0
    %434 = vmatprep.subr.mxu0 0.0
    %435 = vmatpush1.msra.mxu0 0.0
    %436 = vmatprep.subr.mxu0 0.0
    %437 = vmatpush1.msra.mxu0 0.0
    %438 = vmatprep.mubr.f32.mxu0 0.0
    %439 = vmatmul.mubr.f32.gmra.mrb[0].mxu0 %v369
    %v440 = vpop.f32.mrb[0].mxu0
    %v441 = vadd.f32 %v366, %v440
    %v442 = vpop.f32.mrb[0].mxu0
    %443 = vmatprep.mubr.f32.mxu0 0.0
    %444 = vmatmul.mubr.f32.gmra.mrb[0].mxu0 %v372
    %v445 = vpop.f32.mrb[0].mxu0
    %v446 = vadd.f32 %v366, %v445
    %v447 = vpop.f32.mrb[0].mxu0
    %448 = vdwg.mxu0
    %v449 = vsub.f32 0.0, %v441
    %v450 = vsub.f32 0.0, %v446
    %v451 = vmul.f32 %v449, 1.442695
    %v452 = vpow.pop %v451
    %v453 = vmul.f32 %v450, 1.442695
    %v454 = vpow.pop %v453
    %v455 = vadd.f32 %v452, 1.0
    %v456 = vadd.f32 %v454, 1.0
    %v457 = vrcp.pop %v455
    %v458 = vrcp.pop %v456
    %v459 = vld [vmem:[#allocation5 + $0x78] sm:$0xff]
    %v460 = vld [vmem:[#allocation5 + $0x80] sm:$0xff]
    %v461 = vld [vmem:[#allocation7 + $0x4] sm:$0x1]
    %v462 = vlaneseq
    %v463 = vshrl.u32 %v462, 7
    %v464 = vsub.s32 0, %v463
    %v465 = vrot.slane %v461, %v464
    %v467 = vsel %vm269, %v457, 0
    %v470 = vsel %vm269, %v458, 0
    %472 = vmatprep.subr.mxu0 0.0
    %473 = vmatpush1.msra.mxu0 %v459
    %474 = vmatprep.subr.mxu0 0.0
    %475 = vmatpush1.msra.mxu0 %v460
    %476 = vmatprep.subr.mxu0 0.0
    %477 = vmatpush1.msra.mxu0 0.0
    %478 = vmatprep.subr.mxu0 0.0
    %479 = vmatpush1.msra.mxu0 0.0
    %480 = vmatprep.subr.mxu0 0.0
    %481 = vmatpush1.msra.mxu0 0.0
    %482 = vmatprep.subr.mxu0 0.0
    %483 = vmatpush1.msra.mxu0 0.0
    %484 = vmatprep.subr.mxu0 0.0
    %485 = vmatpush1.msra.mxu0 0.0
    %486 = vmatprep.subr.mxu0 0.0
    %487 = vmatpush1.msra.mxu0 0.0
    %488 = vmatprep.subr.mxu0 0.0
    %489 = vmatpush1.msra.mxu0 0.0
    %490 = vmatprep.subr.mxu0 0.0
    %491 = vmatpush1.msra.mxu0 0.0
    %492 = vmatprep.subr.mxu0 0.0
    %493 = vmatpush1.msra.mxu0 0.0
    %494 = vmatprep.subr.mxu0 0.0
    %495 = vmatpush1.msra.mxu0 0.0
    %496 = vmatprep.subr.mxu0 0.0
    %497 = vmatpush1.msra.mxu0 0.0
    %498 = vmatprep.subr.mxu0 0.0
    %499 = vmatpush1.msra.mxu0 0.0
    %500 = vmatprep.subr.mxu0 0.0
    %501 = vmatpush1.msra.mxu0 0.0
    %502 = vmatprep.subr.mxu0 0.0
    %503 = vmatpush1.msra.mxu0 0.0
    %504 = vmatprep.subr.mxu0 0.0
    %505 = vmatpush1.msra.mxu0 0.0
    %506 = vmatprep.subr.mxu0 0.0
    %507 = vmatpush1.msra.mxu0 0.0
    %508 = vmatprep.subr.mxu0 0.0
    %509 = vmatpush1.msra.mxu0 0.0
    %510 = vmatprep.subr.mxu0 0.0
    %511 = vmatpush1.msra.mxu0 0.0
    %512 = vmatprep.subr.mxu0 0.0
    %513 = vmatpush1.msra.mxu0 0.0
    %514 = vmatprep.subr.mxu0 0.0
    %515 = vmatpush1.msra.mxu0 0.0
    %516 = vmatprep.subr.mxu0 0.0
    %517 = vmatpush1.msra.mxu0 0.0
    %518 = vmatprep.subr.mxu0 0.0
    %519 = vmatpush1.msra.mxu0 0.0
    %520 = vmatprep.subr.mxu0 0.0
    %521 = vmatpush1.msra.mxu0 0.0
    %522 = vmatprep.subr.mxu0 0.0
    %523 = vmatpush1.msra.mxu0 0.0
    %524 = vmatprep.subr.mxu0 0.0
    %525 = vmatpush1.msra.mxu0 0.0
    %526 = vmatprep.subr.mxu0 0.0
    %527 = vmatpush1.msra.mxu0 0.0
    %528 = vmatprep.subr.mxu0 0.0
    %529 = vmatpush1.msra.mxu0 0.0
    %530 = vmatprep.subr.mxu0 0.0
    %531 = vmatpush1.msra.mxu0 0.0
    %532 = vmatprep.subr.mxu0 0.0
    %533 = vmatpush1.msra.mxu0 0.0
    %534 = vmatprep.subr.mxu0 0.0
    %535 = vmatpush1.msra.mxu0 0.0
    %536 = vmatprep.mubr.f32.mxu0 0.0
    %537 = vmatmul.mubr.f32.gmra.mrb[0].mxu0 %v467
    %v538 = vpop.f32.mrb[0].mxu0
    %v539 = vadd.f32 %v465, %v538
    %v540 = vpop.f32.mrb[0].mxu0
    %541 = vmatprep.mubr.f32.mxu0 0.0
    %542 = vmatmul.mubr.f32.gmra.mrb[0].mxu0 %v470
    %v543 = vpop.f32.mrb[0].mxu0
    %v544 = vadd.f32 %v465, %v543
    %v545 = vpop.f32.mrb[0].mxu0
    %546 = vdwg.mxu0
    %v547 = vsub.f32 0.0, %v539
    %v548 = vsub.f32 0.0, %v544
    %v549 = vmul.f32 %v547, 1.442695
    %v550 = vpow.pop %v549
    %v551 = vmul.f32 %v548, 1.442695
    %v552 = vpow.pop %v551
    %v553 = vadd.f32 %v550, 1.0
    %v554 = vadd.f32 %v552, 1.0
    %v555 = vrcp.pop %v553
    %v556 = vrcp.pop %v554
    %v557 = vld [vmem:[#allocation5 + $0x88] sm:$0xff]
    %v558 = vld [vmem:[#allocation5 + $0x90] sm:$0xff]
    %v559 = vld [vmem:[#allocation5 + $0x98] sm:$0xff]
    %v560 = vld [vmem:[#allocation5 + $0xa0] sm:$0xff]
    %v561 = vld [vmem:[#allocation7 + $0x5] sm:$0x1]
    %v562 = vlaneseq
    %v563 = vshrl.u32 %v562, 7
    %v564 = vsub.s32 0, %v563
    %v565 = vrot.slane %v561, %v564
    %v567 = vsel %vm170, %v555, 0
    %v570 = vsel %vm170, %v556, 0
    %572 = vmatprep.subr.mxu0 0.0
    %573 = vmatpush1.msra.mxu0 %v557
    %574 = vmatprep.subr.mxu0 0.0
    %575 = vmatpush1.msra.mxu0 %v558
    %576 = vmatprep.subr.mxu0 0.0
    %577 = vmatpush1.msra.mxu0 %v559
    %578 = vmatprep.subr.mxu0 0.0
    %579 = vmatpush1.msra.mxu0 %v560
    %580 = vmatprep.subr.mxu0 0.0
    %581 = vmatpush1.msra.mxu0 0.0
    %582 = vmatprep.subr.mxu0 0.0
    %583 = vmatpush1.msra.mxu0 0.0
    %584 = vmatprep.subr.mxu0 0.0
    %585 = vmatpush1.msra.mxu0 0.0
    %586 = vmatprep.subr.mxu0 0.0
    %587 = vmatpush1.msra.mxu0 0.0
    %588 = vmatprep.subr.mxu0 0.0
    %589 = vmatpush1.msra.mxu0 0.0
    %590 = vmatprep.subr.mxu0 0.0
    %591 = vmatpush1.msra.mxu0 0.0
    %592 = vmatprep.subr.mxu0 0.0
    %593 = vmatpush1.msra.mxu0 0.0
    %594 = vmatprep.subr.mxu0 0.0
    %595 = vmatpush1.msra.mxu0 0.0
    %596 = vmatprep.subr.mxu0 0.0
    %597 = vmatpush1.msra.mxu0 0.0
    %598 = vmatprep.subr.mxu0 0.0
    %599 = vmatpush1.msra.mxu0 0.0
    %600 = vmatprep.subr.mxu0 0.0
    %601 = vmatpush1.msra.mxu0 0.0
    %602 = vmatprep.subr.mxu0 0.0
    %603 = vmatpush1.msra.mxu0 0.0
    %604 = vmatprep.subr.mxu0 0.0
    %605 = vmatpush1.msra.mxu0 0.0
    %606 = vmatprep.subr.mxu0 0.0
    %607 = vmatpush1.msra.mxu0 0.0
    %608 = vmatprep.subr.mxu0 0.0
    %609 = vmatpush1.msra.mxu0 0.0
    %610 = vmatprep.subr.mxu0 0.0
    %611 = vmatpush1.msra.mxu0 0.0
    %612 = vmatprep.subr.mxu0 0.0
    %613 = vmatpush1.msra.mxu0 0.0
    %614 = vmatprep.subr.mxu0 0.0
    %615 = vmatpush1.msra.mxu0 0.0
    %616 = vmatprep.subr.mxu0 0.0
    %617 = vmatpush1.msra.mxu0 0.0
    %618 = vmatprep.subr.mxu0 0.0
    %619 = vmatpush1.msra.mxu0 0.0
    %620 = vmatprep.subr.mxu0 0.0
    %621 = vmatpush1.msra.mxu0 0.0
    %622 = vmatprep.subr.mxu0 0.0
    %623 = vmatpush1.msra.mxu0 0.0
    %624 = vmatprep.subr.mxu0 0.0
    %625 = vmatpush1.msra.mxu0 0.0
    %626 = vmatprep.subr.mxu0 0.0
    %627 = vmatpush1.msra.mxu0 0.0
    %628 = vmatprep.subr.mxu0 0.0
    %629 = vmatpush1.msra.mxu0 0.0
    %630 = vmatprep.subr.mxu0 0.0
    %631 = vmatpush1.msra.mxu0 0.0
    %632 = vmatprep.subr.mxu0 0.0
    %633 = vmatpush1.msra.mxu0 0.0
    %634 = vmatprep.subr.mxu0 0.0
    %635 = vmatpush1.msra.mxu0 0.0
    %636 = vmatprep.mubr.f32.mxu0 0.0
    %637 = vmatmul.mubr.f32.gmra.mrb[0].mxu0 %v567
    %v638 = vpop.f32.mrb[0].mxu0
    %v639 = vadd.f32 %v565, %v638
    %v640 = vpop.f32.mrb[0].mxu0
    %641 = vmatprep.mubr.f32.mxu0 0.0
    %642 = vmatmul.mubr.f32.gmra.mrb[0].mxu0 %v570
    %v643 = vpop.f32.mrb[0].mxu0
    %v644 = vadd.f32 %v565, %v643
    %v645 = vpop.f32.mrb[0].mxu0
    %646 = vdwg.mxu0
    %v647 = vsub.f32 0.0, %v639
    %v648 = vsub.f32 0.0, %v644
    %v649 = vmul.f32 %v647, 1.442695
    %v650 = vpow.pop %v649
    %v651 = vmul.f32 %v648, 1.442695
    %v652 = vpow.pop %v651
    %v653 = vadd.f32 %v650, 1.0
    %v654 = vadd.f32 %v652, 1.0
    %v655 = vrcp.pop %v653
    %v656 = vrcp.pop %v654
    %657 = vrot.lane.b32.xlu0 %v359, 64
    %v658 = vpop.permute.xlu0 %657
    %659 = vrot.lane.b32.xlu0 %v360, 64
    %v660 = vpop.permute.xlu0 %659
    %v663 = vsel %vm69, %v655, %v658
    %v664 = vsel %vm69, %v656, %v660
    %vm665 = vcmask 588800
    %v666 = vsel %vm665, %v663, 0.0
    %v667 = vsel %vm665, %v664, 0.0
    %668 = vst [vmem:[#allocation8] sm:$0xff] %v666
    %669 = vst [vmem:[#allocation8 + $0x8] sm:$0xff] %v667
    // Predicated region
    $region26: #{tpu_custom_call.1} parent=1 // pred_check
      _
    $region27: #{tpu_custom_call.1} parent=1 // pred_check_branch
      %671 = sbr.rel (0) target = $region29
    $region28: #{tpu_custom_call.1} parent=1 // pred_region
      %s673 = ssub.s32 256, 256
      %674 = vsyncadd [#allocation4], %s673
      %s675 = sshll.u32 [#allocation8], 4
      %s676 = int_to_ptr.vmem [resolvable:$true] %s675
      %681 = dma.vmem_to_hbm [thread:$0]  %s676, 256, %s3, [#allocation4], 128, 128, 8
    $region29: #{tpu_custom_call.1} parent=1 // pred_fallthru
      _
    // Predicated region
    $region30: #{tpu_custom_call.1} parent=1 // pred_check
      _
    $region31: #{tpu_custom_call.1} parent=1 // pred_check_branch
      %683 = sbr.rel (0) target = $region33
    $region32: #{tpu_custom_call.1} parent=1 // pred_region
      %684 = dma.done [#allocation4], 256
    $region33: #{tpu_custom_call.1} parent=1 // pred_fallthru
      _
    %685 = vsyncpa [#allocation3], 1
    %686 = vsyncpa [#allocation6], 1
    %687 = vsyncpa [#allocation4], 1

</llo_original>
